<compile_context>
chip_gen: v5e
topology: v5e:2x2
jax: 0.10.0
libtpu: 0.0.40
codegen_flags: <defaults>
</compile_context>

<pallas_src>
import functools

import jax
import jax.numpy as jnp
from jax.experimental import pallas as pl
from jax.experimental.pallas import tpu as pltpu


def _round_up(n: int, m: int) -> int:
    return ((n + m - 1) // m) * m


def _num_tensorcores() -> int:
    """Trace-time heuristic for TensorCores per device (v5e/v6e: 1, v7x: 2)."""
    try:
        d = jax.devices()[0]
        n = getattr(d, "num_cores", None)
        if isinstance(n, int) and n > 0:
            return n
        kind = str(getattr(d, "device_kind", "")).lower()
        if "v7" in kind:
            return 2
    except Exception:
        pass
    return 1


def _qnet_kernel(x_ref, w1_ref, b1_ref, w2_ref, b2_ref, out_ref):
    # Cast activations to bf16 in-kernel (VPU), feed MXU, accumulate in f32.
    x = x_ref[...].astype(w1_ref.dtype)                      # [TB, D] f32 -> bf16
    h = jnp.dot(x, w1_ref[...], preferred_element_type=jnp.float32)   # [TB, F1]
    h = jnp.maximum(h + b1_ref[...], 0.0)                    # bias + ReLU in f32
    o = jnp.dot(h.astype(w2_ref.dtype), w2_ref[...],
                preferred_element_type=jnp.float32)          # [TB, A]
    out_ref[...] = o + b2_ref[...]                           # f32, no extra cast


def prepare_qnetwork_params(w1, b1, w2, b2):
    """One-time parameter prep (hoisted out of the per-call forward):
       weights -> bf16 for the MXU feed, biases -> f32 row vectors."""
    return (w1.astype(jnp.bfloat16),
            b1.reshape(1, -1).astype(jnp.float32),
            w2.astype(jnp.bfloat16),
            b2.reshape(1, -1).astype(jnp.float32))


@functools.partial(jax.jit, static_argnames=("block_b",))
def qnetwork_forward(state, w1_bf16, b1_row, w2_bf16, b2_row, *, block_b: int = 512):
    """state: [B, input_dim] f32; w1_bf16: [input_dim, fc1] bf16; b1_row: [1, fc1] f32;
       w2_bf16: [fc1, n_action] bf16; b2_row: [1, n_action] f32 -> [B, n_action] f32."""
    B, D = state.shape
    F1 = w1_bf16.shape[1]
    A = w2_bf16.shape[1]

    # Batch tiling: one tile on single-TC chips, one tile per TC on v7x,
    # capped at block_b rows per tile (sublanes = f32, so multiples of 8 are fine).
    n_tc = _num_tensorcores()
    TB = max(8, min(block_b, _round_up(pl.cdiv(B, n_tc), 8)))
    B_p = _round_up(B, TB)
    n_tiles = B_p // TB

    x_p = state if B_p == B else jnp.zeros((B_p, D), state.dtype).at[:B].set(state)

    # True (unpadded) cost hint for XLA's scheduler.
    flops = 2 * B * D * F1 + 2 * B * F1 * A
    bytes_accessed = (B * D * 4 + D * F1 * 2 + F1 * A * 2
                      + F1 * 4 + A * 4 + B_p * A * 4)

    out_p = pl.pallas_call(
        _qnet_kernel,
        out_shape=jax.ShapeDtypeStruct((B_p, A), jnp.float32),
        grid=(n_tiles,),
        in_specs=[
            pl.BlockSpec((TB, D), lambda i: (i, 0)),    # activations, streamed per tile
            pl.BlockSpec((D, F1), lambda i: (0, 0)),    # weights resident across tiles
            pl.BlockSpec((1, F1), lambda i: (0, 0)),
            pl.BlockSpec((F1, A), lambda i: (0, 0)),
            pl.BlockSpec((1, A), lambda i: (0, 0)),
        ],
        out_specs=pl.BlockSpec((TB, A), lambda i: (i, 0)),
        compiler_params=pltpu.CompilerParams(
            dimension_semantics=("parallel",)),         # megacore-shard batch on v7x
        cost_estimate=pl.CostEstimate(
            flops=flops, transcendentals=0, bytes_accessed=bytes_accessed),
    )(x_p, w1_bf16, b1_row, w2_bf16, b2_row)

    return out_p if B_p == B else out_p[:B]


def init_qnetwork_params(key, input_dim, fc1_dim, n_action):
    """Mirrors torch.nn.Linear default init: U(-1/sqrt(fan_in), 1/sqrt(fan_in)).
       Weights stored as [in, out] (transposed vs. PyTorch's [out, in])."""
    k1, k2, k3, k4 = jax.random.split(key, 4)
    bound1 = 1.0 / jnp.sqrt(input_dim)
    bound2 = 1.0 / jnp.sqrt(fc1_dim)
    w1 = jax.random.uniform(k1, (input_dim, fc1_dim), jnp.float32, -bound1, bound1)
    b1 = jax.random.uniform(k2, (fc1_dim,), jnp.float32, -bound1, bound1)
    w2 = jax.random.uniform(k3, (fc1_dim, n_action), jnp.float32, -bound2, bound2)
    b2 = jax.random.uniform(k4, (n_action,), jnp.float32, -bound2, bound2)
    return w1, b1, w2, b2


if __name__ == "__main__":
    # Small shapes consistent with the module's forward: state [batch, input_dim].
    batch = 16
    input_dim = 8
    fc1_dim = 32
    n_action = 4
    # fc2_dim, fc3_dim, fc4_dim are unused by the PyTorch module's network.
    # TODO(synk): Adagrad optimizer / loss are training-time state, not part of forward.

    key = jax.random.PRNGKey(0)
    k_state, k_params = jax.random.split(key)

    state = jax.random.normal(k_state, (batch, input_dim), jnp.float32)
    w1, b1, w2, b2 = init_qnetwork_params(k_params, input_dim, fc1_dim, n_action)

    # One-time parameter prep, hoisted out of the forward (re-used across calls).
    params = prepare_qnetwork_params(w1, b1, w2, b2)

    actions = qnetwork_forward(state, *params)
    actions = jax.block_until_ready(actions)

    # Reference with the same bf16-feed / f32-accumulate math as the kernel.
    xb = state.astype(jnp.bfloat16)
    w1b, b1r, w2b, b2r = params
    h_ref = jnp.maximum(
        jnp.dot(xb, w1b, preferred_element_type=jnp.float32) + b1r, 0.0)
    ref = jnp.dot(h_ref.astype(jnp.bfloat16), w2b,
                  preferred_element_type=jnp.float32) + b2r

    assert actions.shape == (batch, n_action)
    assert jnp.allclose(actions, ref, atol=1e-3, rtol=1e-3)
    # Sanity check against the full-f32 forward (loose tolerance for bf16 feed).
    ref_f32 = jnp.maximum(state @ w1 + b1, 0.0) @ w2 + b2
    assert jnp.allclose(actions, ref_f32, atol=5e-2, rtol=5e-2)

    print("KERNEL_OK")
</pallas_src>

<mosaic_0001>
module attributes {stable_mosaic.version = 11 : i64} {
  func.func @_qnet_kernel(%arg0: i32, %arg1: memref<16x8xf32, #tpu.memory_space<vmem>>, %arg2: memref<8x32xbf16, #tpu.memory_space<vmem>>, %arg3: memref<1x32xf32, #tpu.memory_space<vmem>>, %arg4: memref<32x4xbf16, #tpu.memory_space<vmem>>, %arg5: memref<1x4xf32, #tpu.memory_space<vmem>>, %arg6: memref<16x4xf32, #tpu.memory_space<vmem>>) attributes {dimension_semantics = [#tpu.dimension_semantics<parallel>], iteration_bounds = array<i64: 1>, scalar_prefetch = 0 : i64, scratch_operands = 0 : i64, tpu.core_type = #tpu.core_type<tc>, window_params = [{transform_indices = @transform_0, window_bounds = array<i64: 16, 8>}, {pipeline_mode = #tpu.pipeline_mode<synchronous>, transform_indices = @transform_1, window_bounds = array<i64: 8, 32>}, {pipeline_mode = #tpu.pipeline_mode<synchronous>, transform_indices = @transform_2, window_bounds = array<i64: 1, 32>}, {pipeline_mode = #tpu.pipeline_mode<synchronous>, transform_indices = @transform_3, window_bounds = array<i64: 32, 4>}, {pipeline_mode = #tpu.pipeline_mode<synchronous>, transform_indices = @transform_4, window_bounds = array<i64: 1, 4>}, {transform_indices = @transform_5, window_bounds = array<i64: 16, 4>}]} {
    %c0 = arith.constant 0 : index
    %c0_0 = arith.constant 0 : index
    %0 = vector.load %arg1[%c0, %c0_0] : memref<16x8xf32, #tpu.memory_space<vmem>>, vector<16x8xf32>
    %1 = arith.truncf %0 : vector<16x8xf32> to vector<16x8xbf16>
    %c0_1 = arith.constant 0 : index
    %c0_2 = arith.constant 0 : index
    %2 = vector.load %arg2[%c0_1, %c0_2] : memref<8x32xbf16, #tpu.memory_space<vmem>>, vector<8x32xbf16>
    %cst = arith.constant dense<0.000000e+00> : vector<16x32xf32>
    %3 = tpu.matmul %1, %2, %cst {dimension_numbers = #tpu.dot_dimension_numbers<[1], [0], [0], [1], [0, 0, 1, 1], [], []>} : vector<16x8xbf16>, vector<8x32xbf16>, vector<16x32xf32> -> vector<16x32xf32>
    %c0_3 = arith.constant 0 : index
    %c0_4 = arith.constant 0 : index
    %4 = vector.load %arg3[%c0_3, %c0_4] : memref<1x32xf32, #tpu.memory_space<vmem>>, vector<1x32xf32>
    %5 = vector.broadcast %4 : vector<1x32xf32> to vector<16x32xf32>
    %6 = arith.addf %3, %5 : vector<16x32xf32>
    %cst_5 = arith.constant 0.000000e+00 : f32
    %7 = vector.broadcast %cst_5 : f32 to vector<16x32xf32>
    %8 = arith.maximumf %6, %7 : vector<16x32xf32>
    %9 = arith.truncf %8 : vector<16x32xf32> to vector<16x32xbf16>
    %c0_6 = arith.constant 0 : index
    %c0_7 = arith.constant 0 : index
    %10 = vector.load %arg4[%c0_6, %c0_7] : memref<32x4xbf16, #tpu.memory_space<vmem>>, vector<32x4xbf16>
    %cst_8 = arith.constant dense<0.000000e+00> : vector<16x4xf32>
    %11 = tpu.matmul %9, %10, %cst_8 {dimension_numbers = #tpu.dot_dimension_numbers<[1], [0], [0], [1], [0, 0, 1, 1], [], []>} : vector<16x32xbf16>, vector<32x4xbf16>, vector<16x4xf32> -> vector<16x4xf32>
    %c0_9 = arith.constant 0 : index
    %c0_10 = arith.constant 0 : index
    %12 = vector.load %arg5[%c0_9, %c0_10] : memref<1x4xf32, #tpu.memory_space<vmem>>, vector<1x4xf32>
    %13 = vector.broadcast %12 : vector<1x4xf32> to vector<16x4xf32>
    %14 = arith.addf %11, %13 : vector<16x4xf32>
    %c0_11 = arith.constant 0 : index
    %c0_12 = arith.constant 0 : index
    %15 = vector.load %arg6[%c0_11, %c0_12] : memref<16x4xf32, #tpu.memory_space<vmem>>, vector<16x4xf32>
    tpu.vector_store %arg6[%c0_11, %c0_12], %14 {strides = array<i32>} : memref<16x4xf32, #tpu.memory_space<vmem>>, vector<16x4xf32>,
    return
  }
  func.func @transform_0(%arg0: i32) -> (i32, i32) {
    %c0_i32 = arith.constant 0 : i32
    %c0_i32_0 = arith.constant 0 : i32
    return %arg0, %c0_i32 : i32, i32
  }
  func.func @transform_1(%arg0: i32) -> (i32, i32) {
    %c0_i32 = arith.constant 0 : i32
    %c0_i32_0 = arith.constant 0 : i32
    %c0_i32_1 = arith.constant 0 : i32
    return %c0_i32, %c0_i32_0 : i32, i32
  }
  func.func @transform_2(%arg0: i32) -> (i32, i32) {
    %c0_i32 = arith.constant 0 : i32
    %c0_i32_0 = arith.constant 0 : i32
    %c0_i32_1 = arith.constant 0 : i32
    return %c0_i32, %c0_i32_0 : i32, i32
  }
  func.func @transform_3(%arg0: i32) -> (i32, i32) {
    %c0_i32 = arith.constant 0 : i32
    %c0_i32_0 = arith.constant 0 : i32
    %c0_i32_1 = arith.constant 0 : i32
    return %c0_i32, %c0_i32_0 : i32, i32
  }
  func.func @transform_4(%arg0: i32) -> (i32, i32) {
    %c0_i32 = arith.constant 0 : i32
    %c0_i32_0 = arith.constant 0 : i32
    %c0_i32_1 = arith.constant 0 : i32
    return %c0_i32, %c0_i32_0 : i32, i32
  }
  func.func @transform_5(%arg0: i32) -> (i32, i32) {
    %c0_i32 = arith.constant 0 : i32
    %c0_i32_0 = arith.constant 0 : i32
    return %arg0, %c0_i32 : i32, i32
  }
}

</mosaic_0001>

<llo_original>
// kernel: qnetwork_forward.1
$region0: #{qnetwork_forward.1}
  #allocation0 [shape = 'u32[]', space=smem, size = 0x4, offset = 0x4, fixed_abs, tag = 'smem constant byte address 0x4 - core index']
  #allocation1 [shape = 'u32[72,128]{1,0:T(1,128)}', space=vmem, size = 0x9000, scoped, tag = 'internal scratch']
  %s0 = inlined_call_operand.vmem [shape: f32[16,8], index: 0, kind: input, shape index: {}]
  %s1 = inlined_call_operand.vmem [shape: bf16[8,32], index: 1, kind: input, shape index: {}]
  %s2 = inlined_call_operand.vmem [shape: f32[1,32], index: 2, kind: input, shape index: {}]
  %s3 = inlined_call_operand.vmem [shape: bf16[32,4], index: 3, kind: input, shape index: {}]
  %s4 = inlined_call_operand.vmem [shape: f32[1,4], index: 4, kind: input, shape index: {}]
  %s5 = inlined_call_operand.vmem [shape: f32[16,4], index: 5, kind: output, shape index: {}]
  %s6 = sld [smem:[#allocation0]]
  $region30: #{qnetwork_forward.1} parent=0
    _
  %s8 = ssub.s32 1, %s6
  %s9 = scalar_select 0, %s8, %s6
  // Predicated region
  $region2: #{qnetwork_forward.1} parent=0 // pred_check
    _
  $region3: #{qnetwork_forward.1} parent=0 // pred_check_branch
    %11 = sbr.rel (0) target = $region5
  $region4: #{qnetwork_forward.1} parent=0 // pred_region
    _
  $region5: #{qnetwork_forward.1} parent=0 // pred_fallthru
    _
  // Predicated region
  $region6: #{qnetwork_forward.1} parent=0 // pred_check
    _
  $region7: #{qnetwork_forward.1} parent=0 // pred_check_branch
    %13 = sbr.rel (0) target = $region9
  $region8: #{qnetwork_forward.1} parent=0 // pred_region
    _
  $region9: #{qnetwork_forward.1} parent=0 // pred_fallthru
    _
  // Predicated region
  $region10: #{qnetwork_forward.1} parent=0 // pred_check
    _
  $region11: #{qnetwork_forward.1} parent=0 // pred_check_branch
    %15 = sbr.rel (0) target = $region13
  $region12: #{qnetwork_forward.1} parent=0 // pred_region
    _
  $region13: #{qnetwork_forward.1} parent=0 // pred_fallthru
    _
  // Predicated region
  $region14: #{qnetwork_forward.1} parent=0 // pred_check
    _
  $region15: #{qnetwork_forward.1} parent=0 // pred_check_branch
    %17 = sbr.rel (0) target = $region17
  $region16: #{qnetwork_forward.1} parent=0 // pred_region
    _
  $region17: #{qnetwork_forward.1} parent=0 // pred_fallthru
    _
  // Predicated region
  $region18: #{qnetwork_forward.1} parent=0 // pred_check
    _
  $region19: #{qnetwork_forward.1} parent=0 // pred_check_branch
    %19 = sbr.rel (0) target = $region21
  $region20: #{qnetwork_forward.1} parent=0 // pred_region
    _
  $region21: #{qnetwork_forward.1} parent=0 // pred_fallthru
    _
  %v21 = vld [vmem:[%s0] sm:$0xff]
  %v22 = vld [vmem:[%s0 + $0x8] sm:$0xff]
  %v23 = vpack.c.bf16 %v22, %v21
  %v24 = vld [vmem:[%s1] sm:$0xf]
  %v25 = vld [vmem:[%s2] sm:$0x1]
  %v27 = vperm.slane %v25, 0
  %vm29 = vcmask 64512
  %v31 = vsel %vm29, %v23, 0
  %vm33 = vcmask 1043456
  %v35 = vsel %vm33, %v24, 0
  %37 = vmatpush.bf16.msra.mxu0 0
  %38 = vmatpush.bf16.msra.mxu0 0
  %39 = vmatpush.bf16.msra.mxu0 0
  %40 = vmatpush.bf16.msra.mxu0 0
  %41 = vmatpush.bf16.msra.mxu0 0
  %42 = vmatpush.bf16.msra.mxu0 0
  %43 = vmatpush.bf16.msra.mxu0 0
  %44 = vmatpush.bf16.msra.mxu0 %v35
  %45 = vmatmul.bf16.gmra.mxu0 %v31
  %v46 = vpop.f32.mrf.mxu0
  %v47 = vadd.f32 %v27, %v46
  %v48 = vpop.f32.mrf.mxu0
  %v49 = vadd.f32 %v27, %v48
  %50 = vdwg.mxu0
  %v51 = vmax.f32 %v47, 0.0
  %v52 = vmax.f32 %v49, 0.0
  %v53 = vpack.c.bf16 %v52, %v51
  %v54 = vld [vmem:[%s3] sm:$0xf]
  %v55 = vld [vmem:[%s3 + $0x4] sm:$0xf]
  %v56 = vld [vmem:[%s3 + $0x8] sm:$0xf]
  %v57 = vld [vmem:[%s3 + $0xc] sm:$0xf]
  %v58 = vld [vmem:[%s4] sm:$0x1]
  %v60 = vperm.slane %v58, 0
  %v66 = vunpack.c.l.b16 %v54
  %v67 = vunpack.c.l.b16 %v55
  %v68 = vunpack.c.l.b16 %v56
  %v69 = vunpack.c.l.b16 %v57
  %v70 = vpack.c.b16 %v67, %v66
  %v71 = vpack.c.b16 %v69, %v68
  %vm74 = vcmask 261120
  %v76 = vsel %vm74, %v53, 0
  %78 = vmatpush.bf16.msra.mxu0 0
  %79 = vmatpush.bf16.msra.mxu0 0
  %80 = vmatpush.bf16.msra.mxu0 0
  %81 = vmatpush.bf16.msra.mxu0 0
  %82 = vmatpush.bf16.msra.mxu0 0
  %83 = vmatpush.bf16.msra.mxu0 0
  %84 = vmatpush.bf16.msra.mxu0 %v71
  %85 = vmatpush.bf16.msra.mxu0 %v70
  %86 = vmatmul.bf16.gmra.mxu0 %v76
  %v87 = vpop.f32.mrf.mxu0
  %v88 = vadd.f32 %v60, %v87
  %v89 = vpop.f32.mrf.mxu0
  %v90 = vadd.f32 %v60, %v89
  %91 = vdwg.mxu0
  %vm92 = vcmask 31744
  %93 = vst.msk [vmem:[%s5] sm:$0xff] %vm92, %v88
  %94 = vst.msk [vmem:[%s5 + $0x8] sm:$0xff] %vm92, %v90
  // Predicated region
  $region22: #{qnetwork_forward.1} parent=0 // pred_check
    _
  $region23: #{qnetwork_forward.1} parent=0 // pred_check_branch
    %96 = sbr.rel (0) target = $region25
  $region24: #{qnetwork_forward.1} parent=0 // pred_region
    _
  $region25: #{qnetwork_forward.1} parent=0 // pred_fallthru
    _
  // Predicated region
  $region26: #{qnetwork_forward.1} parent=0 // pred_check
    _
  $region27: #{qnetwork_forward.1} parent=0 // pred_check_branch
    %98 = sbr.rel (0) target = $region29
  $region28: #{qnetwork_forward.1} parent=0 // pred_region
    _
  $region29: #{qnetwork_forward.1} parent=0 // pred_fallthru
    _

</llo_original>
